<compile_context>
chip_gen: v7x
topology: tpu7x:2x2x1
jax: 0.10.0
libtpu: 0.0.40
codegen_flags: <defaults>
</compile_context>

<pallas_src>
import functools

import jax
import jax.numpy as jnp
from jax.experimental import pallas as pl
from jax.experimental.pallas import tpu as pltpu


NEG_SLOPE = 0.01              # nn.LeakyReLU() default; max(y, s*y) below assumes 0 < s < 1
_TILE_BUDGET_BYTES = 4 * 1024 * 1024     # single-buffered in+out tile budget per grid step
_VMEM_LIMIT_BYTES = 32 * 1024 * 1024     # explicit scoped-VMEM limit (fits v5e/v6e/v7x)


def _pick_row_tile(h, per_row_bytes):
    """Input rows handled per grid step: multiple of 8 (or full H), largest under budget."""
    cands = sorted({d for d in range(8, h + 1, 8) if h % d == 0} | {h})
    th = cands[0]
    for c in cands:
        if c * per_row_bytes <= _TILE_BUDGET_BYTES:
            th = c
    return th


def _tconv_relu_kernel(x_ref, r_ref, wl_ref, b_ref, o_ref, *, cin, cout):
    # x_ref : (Cin, TH, W)          native NCHW input rows
    # r_ref : (W, k*W*k)            constant 0/1 spread matrix
    # wl_ref: (Cout*Cin, k*W*k)     lane coefficients, row = (cout, cin)
    # b_ref : (Cout, k*W*k)         bias broadcast along lanes
    # o_ref : (Cout, TH, k*W*k)     block of final output viewed as (N, Cout, H, k*W*k)
    r = r_ref[...]
    # Spread each input channel once on the MXU (exact: a single 1.0 per output lane):
    #   s[ci][th, kh*(W*k) + w*k + kw] = x[ci, th, w]
    s = [jnp.dot(x_ref[ci], r, preferred_element_type=jnp.float32) for ci in range(cin)]
    # Channel mix on the VPU with lane-resident weights (already in final (kh,w,kw) order).
    # TODO(synk): for large Cin/Cout this unrolled VPU mix should move back onto the MXU.
    for co in range(cout):
        acc = b_ref[pl.ds(co, 1), :]                              # (1, k*W*k)
        for ci in range(cin):
            acc = acc + wl_ref[pl.ds(co * cin + ci, 1), :] * s[ci]
        o_ref[co] = jnp.maximum(acc, NEG_SLOPE * acc).astype(o_ref.dtype)   # LeakyReLU


def tconv_leaky_relu(x, weight, bias, kernel_size, stride):
    """ConvTranspose2d(kernel_size == stride, padding=0, output_padding=0, groups=1) + LeakyReLU.

    x:      (N, Cin, H, W)      NCHW (PyTorch layout)
    weight: (Cin, Cout, k, k)   PyTorch ConvTranspose2d weight layout
    bias:   (Cout,)
    returns (N, Cout, H*k, W*k) NCHW
    """
    assert kernel_size == stride, "kernel only supports kernel_size == stride"
    # TODO(synk): general stride != kernel_size (overlapping taps) would need a scatter-add.
    N, Cin, H, W = x.shape
    k = kernel_size
    Cout = weight.shape[1]
    Wk = W * k
    kWk = k * Wk
    f32 = jnp.float32

    # 0/1 spread matrix: R[w, p] = 1  iff  (p % (W*k)) // k == w     (shape (W, k*W*k))
    p = jnp.arange(kWk)
    spread = ((p[None, :] % Wk) // k == jnp.arange(W)[:, None]).astype(f32)

    # Lane-coefficient table: wl[(co, ci), p] = weight[ci, co, p // (W*k), p % k]
    wt = jnp.transpose(weight, (1, 0, 2, 3)).astype(f32)                 # (Cout, Cin, kh, kw)
    wl = jnp.broadcast_to(wt[:, :, :, None, :], (Cout, Cin, k, W, k))
    wl = wl.reshape(Cout * Cin, kWk)

    bias_tab = jnp.broadcast_to(bias.astype(f32)[:, None], (Cout, kWk))

    per_row_bytes = 4 * (Cin * W + Cout * kWk)       # input + output bytes per image row
    TH = _pick_row_tile(H, per_row_bytes)
    grid = (N, H // TH)

    kernel = functools.partial(_tconv_relu_kernel, cin=Cin, cout=Cout)

    cost = pl.CostEstimate(
        flops=2 * N * Cout * Cin * H * W * k * k,
        transcendentals=0,
        bytes_accessed=4 * (N * Cin * H * W + N * Cout * H * W * k * k)
        + 4 * (spread.size + wl.size + bias_tab.size),
    )

    out = pl.pallas_call(
        kernel,
        out_shape=jax.ShapeDtypeStruct((N, Cout, H, kWk), x.dtype),
        grid_spec=pltpu.PrefetchScalarGridSpec(
            num_scalar_prefetch=0,
            grid=grid,
            in_specs=[
                pl.BlockSpec((None, Cin, TH, W), lambda n, t: (n, 0, t, 0)),   # x rows
                pl.BlockSpec((W, kWk), lambda n, t: (0, 0)),                   # spread (const)
                pl.BlockSpec((Cout * Cin, kWk), lambda n, t: (0, 0)),          # weights (const)
                pl.BlockSpec((Cout, kWk), lambda n, t: (0, 0)),                # bias (const)
            ],
            out_specs=pl.BlockSpec((None, Cout, TH, kWk), lambda n, t: (n, 0, t, 0)),
        ),
        compiler_params=pltpu.CompilerParams(
            dimension_semantics=("parallel", "parallel"),
            vmem_limit_bytes=_VMEM_LIMIT_BYTES,
        ),
        cost_estimate=cost,
    )(x, spread, wl, bias_tab)

    # (N, Cout, H, k*W*k) -> (N, Cout, H*k, W*k): pure reshape, no extra HBM pass.
    return out.reshape(N, Cout, H * k, W * k)


def _reference(x, weight, bias, k, s):
    # ConvTranspose2d == lhs-dilated conv with flipped / transposed kernel.
    w_t = jnp.flip(jnp.transpose(weight, (1, 0, 2, 3)), axis=(2, 3))  # (Cout, Cin, k, k)
    ref = jax.lax.conv_general_dilated(
        x, w_t,
        window_strides=(1, 1),
        padding=[(k - 1, k - 1), (k - 1, k - 1)],
        lhs_dilation=(s, s),
        dimension_numbers=("NCHW", "OIHW", "NCHW"),
    )
    ref = ref + bias[None, :, None, None]
    return jnp.where(ref > 0, ref, NEG_SLOPE * ref)


if __name__ == "__main__":
    # TconvReLU(in_channels=4, out_channels=8, kernel_size=2, stride=2)
    N, Cin, H, W = 2, 4, 16, 16
    Cout, k, s = 8, 2, 2

    key = jax.random.PRNGKey(0)
    kx, kw_, kb = jax.random.split(key, 3)
    x = jax.random.normal(kx, (N, Cin, H, W), dtype=jnp.float32)
    # PyTorch ConvTranspose2d weight shape: (in_channels, out_channels, kH, kW)
    weight = jax.random.normal(kw_, (Cin, Cout, k, k), dtype=jnp.float32) * 0.1
    bias = jax.random.normal(kb, (Cout,), dtype=jnp.float32) * 0.1

    out = tconv_leaky_relu(x, weight, bias, kernel_size=k, stride=s)
    out = jax.block_until_ready(out)

    ref = _reference(x, weight, bias, k, s)
    assert out.shape == (N, Cout, H * k, W * k), out.shape
    assert jnp.allclose(out, ref, atol=1e-5, rtol=1e-5), "mismatch vs reference"
    print("KERNEL_OK")
</pallas_src>

<mosaic_0001>
module attributes {stable_mosaic.version = 11 : i64} {
  func.func @_tconv_relu_kernel(%arg0: i32, %arg1: i32, %arg2: memref<1x4x16x16xf32, #tpu.memory_space<vmem>>, %arg3: memref<16x64xf32, #tpu.memory_space<vmem>>, %arg4: memref<32x64xf32, #tpu.memory_space<vmem>>, %arg5: memref<8x64xf32, #tpu.memory_space<vmem>>, %arg6: memref<1x8x16x64xf32, #tpu.memory_space<vmem>>) attributes {dimension_semantics = [#tpu.dimension_semantics<parallel>, #tpu.dimension_semantics<parallel>], iteration_bounds = array<i64: 2, 1>, scalar_prefetch = 0 : i64, scratch_operands = 0 : i64, tpu.core_type = #tpu.core_type<tc>, window_params = [{transform_indices = @transform_0, window_bounds = array<i64: 1, 4, 16, 16>}, {pipeline_mode = #tpu.pipeline_mode<synchronous>, transform_indices = @transform_1, window_bounds = array<i64: 16, 64>}, {pipeline_mode = #tpu.pipeline_mode<synchronous>, transform_indices = @transform_2, window_bounds = array<i64: 32, 64>}, {pipeline_mode = #tpu.pipeline_mode<synchronous>, transform_indices = @transform_3, window_bounds = array<i64: 8, 64>}, {transform_indices = @transform_4, window_bounds = array<i64: 1, 8, 16, 64>}]} {
    %c0 = arith.constant 0 : index
    %c0_0 = arith.constant 0 : index
    %0 = vector.load %arg3[%c0, %c0_0] : memref<16x64xf32, #tpu.memory_space<vmem>>, vector<16x64xf32>
    %c0_1 = arith.constant 0 : index
    %c0_2 = arith.constant 0 : index
    %c0_3 = arith.constant 0 : index
    %c0_4 = arith.constant 0 : index
    %1 = vector.load %arg2[%c0_1, %c0_2, %c0_3, %c0_4] : memref<1x4x16x16xf32, #tpu.memory_space<vmem>>, vector<1x1x16x16xf32>
    %2 = vector.shape_cast %1 : vector<1x1x16x16xf32> to vector<16x16xf32>
    %cst = arith.constant dense<0.000000e+00> : vector<16x64xf32>
    %3 = tpu.matmul %2, %0, %cst {dimension_numbers = #tpu.dot_dimension_numbers<[1], [0], [0], [1], [0, 0, 1, 1], [], []>} : vector<16x16xf32>, vector<16x64xf32>, vector<16x64xf32> -> vector<16x64xf32>
    %c0_5 = arith.constant 0 : index
    %c1 = arith.constant 1 : index
    %c0_6 = arith.constant 0 : index
    %c0_7 = arith.constant 0 : index
    %4 = vector.load %arg2[%c0_5, %c1, %c0_6, %c0_7] : memref<1x4x16x16xf32, #tpu.memory_space<vmem>>, vector<1x1x16x16xf32>
    %5 = vector.shape_cast %4 : vector<1x1x16x16xf32> to vector<16x16xf32>
    %cst_8 = arith.constant dense<0.000000e+00> : vector<16x64xf32>
    %6 = tpu.matmul %5, %0, %cst_8 {dimension_numbers = #tpu.dot_dimension_numbers<[1], [0], [0], [1], [0, 0, 1, 1], [], []>} : vector<16x16xf32>, vector<16x64xf32>, vector<16x64xf32> -> vector<16x64xf32>
    %c0_9 = arith.constant 0 : index
    %c2 = arith.constant 2 : index
    %c0_10 = arith.constant 0 : index
    %c0_11 = arith.constant 0 : index
    %7 = vector.load %arg2[%c0_9, %c2, %c0_10, %c0_11] : memref<1x4x16x16xf32, #tpu.memory_space<vmem>>, vector<1x1x16x16xf32>
    %8 = vector.shape_cast %7 : vector<1x1x16x16xf32> to vector<16x16xf32>
    %cst_12 = arith.constant dense<0.000000e+00> : vector<16x64xf32>
    %9 = tpu.matmul %8, %0, %cst_12 {dimension_numbers = #tpu.dot_dimension_numbers<[1], [0], [0], [1], [0, 0, 1, 1], [], []>} : vector<16x16xf32>, vector<16x64xf32>, vector<16x64xf32> -> vector<16x64xf32>
    %c0_13 = arith.constant 0 : index
    %c3 = arith.constant 3 : index
    %c0_14 = arith.constant 0 : index
    %c0_15 = arith.constant 0 : index
    %10 = vector.load %arg2[%c0_13, %c3, %c0_14, %c0_15] : memref<1x4x16x16xf32, #tpu.memory_space<vmem>>, vector<1x1x16x16xf32>
    %11 = vector.shape_cast %10 : vector<1x1x16x16xf32> to vector<16x16xf32>
    %cst_16 = arith.constant dense<0.000000e+00> : vector<16x64xf32>
    %12 = tpu.matmul %11, %0, %cst_16 {dimension_numbers = #tpu.dot_dimension_numbers<[1], [0], [0], [1], [0, 0, 1, 1], [], []>} : vector<16x16xf32>, vector<16x64xf32>, vector<16x64xf32> -> vector<16x64xf32>
    %c0_17 = arith.constant 0 : index
    %c0_18 = arith.constant 0 : index
    %13 = vector.load %arg5[%c0_17, %c0_18] : memref<8x64xf32, #tpu.memory_space<vmem>>, vector<1x64xf32>
    %c0_19 = arith.constant 0 : index
    %c0_20 = arith.constant 0 : index
    %14 = vector.load %arg4[%c0_19, %c0_20] : memref<32x64xf32, #tpu.memory_space<vmem>>, vector<1x64xf32>
    %15 = vector.broadcast %14 : vector<1x64xf32> to vector<16x64xf32>
    %16 = arith.mulf %15, %3 : vector<16x64xf32>
    %17 = vector.broadcast %13 : vector<1x64xf32> to vector<16x64xf32>
    %18 = arith.addf %17, %16 : vector<16x64xf32>
    %c1_21 = arith.constant 1 : index
    %c0_22 = arith.constant 0 : index
    %19 = vector.load %arg4[%c1_21, %c0_22] : memref<32x64xf32, #tpu.memory_space<vmem>>, vector<1x64xf32>
    %20 = vector.broadcast %19 : vector<1x64xf32> to vector<16x64xf32>
    %21 = arith.mulf %20, %6 : vector<16x64xf32>
    %22 = arith.addf %18, %21 : vector<16x64xf32>
    %c2_23 = arith.constant 2 : index
    %c0_24 = arith.constant 0 : index
    %23 = vector.load %arg4[%c2_23, %c0_24] : memref<32x64xf32, #tpu.memory_space<vmem>>, vector<1x64xf32>
    %24 = vector.broadcast %23 : vector<1x64xf32> to vector<16x64xf32>
    %25 = arith.mulf %24, %9 : vector<16x64xf32>
    %26 = arith.addf %22, %25 : vector<16x64xf32>
    %c3_25 = arith.constant 3 : index
    %c0_26 = arith.constant 0 : index
    %27 = vector.load %arg4[%c3_25, %c0_26] : memref<32x64xf32, #tpu.memory_space<vmem>>, vector<1x64xf32>
    %28 = vector.broadcast %27 : vector<1x64xf32> to vector<16x64xf32>
    %29 = arith.mulf %28, %12 : vector<16x64xf32>
    %30 = arith.addf %26, %29 : vector<16x64xf32>
    %cst_27 = arith.constant 0.00999999977 : f32
    %31 = vector.broadcast %cst_27 : f32 to vector<16x64xf32>
    %32 = arith.mulf %31, %30 : vector<16x64xf32>
    %33 = arith.maximumf %30, %32 : vector<16x64xf32>
    %c0_28 = arith.constant 0 : index
    %c0_29 = arith.constant 0 : index
    %c0_30 = arith.constant 0 : index
    %c0_31 = arith.constant 0 : index
    %34 = vector.load %arg6[%c0_28, %c0_29, %c0_30, %c0_31] : memref<1x8x16x64xf32, #tpu.memory_space<vmem>>, vector<1x1x16x64xf32>
    %35 = vector.shape_cast %34 : vector<1x1x16x64xf32> to vector<16x64xf32>
    %36 = vector.shape_cast %33 : vector<16x64xf32> to vector<1x1x16x64xf32>
    tpu.vector_store %arg6[%c0_28, %c0_29, %c0_30, %c0_31], %36 {strides = array<i32>} : memref<1x8x16x64xf32, #tpu.memory_space<vmem>>, vector<1x1x16x64xf32>,
    %c1_32 = arith.constant 1 : index
    %c0_33 = arith.constant 0 : index
    %37 = vector.load %arg5[%c1_32, %c0_33] : memref<8x64xf32, #tpu.memory_space<vmem>>, vector<1x64xf32>
    %c4 = arith.constant 4 : index
    %c0_34 = arith.constant 0 : index
    %38 = vector.load %arg4[%c4, %c0_34] : memref<32x64xf32, #tpu.memory_space<vmem>>, vector<1x64xf32>
    %39 = vector.broadcast %38 : vector<1x64xf32> to vector<16x64xf32>
    %40 = arith.mulf %39, %3 : vector<16x64xf32>
    %41 = vector.broadcast %37 : vector<1x64xf32> to vector<16x64xf32>
    %42 = arith.addf %41, %40 : vector<16x64xf32>
    %c5 = arith.constant 5 : index
    %c0_35 = arith.constant 0 : index
    %43 = vector.load %arg4[%c5, %c0_35] : memref<32x64xf32, #tpu.memory_space<vmem>>, vector<1x64xf32>
    %44 = vector.broadcast %43 : vector<1x64xf32> to vector<16x64xf32>
    %45 = arith.mulf %44, %6 : vector<16x64xf32>
    %46 = arith.addf %42, %45 : vector<16x64xf32>
    %c6 = arith.constant 6 : index
    %c0_36 = arith.constant 0 : index
    %47 = vector.load %arg4[%c6, %c0_36] : memref<32x64xf32, #tpu.memory_space<vmem>>, vector<1x64xf32>
    %48 = vector.broadcast %47 : vector<1x64xf32> to vector<16x64xf32>
    %49 = arith.mulf %48, %9 : vector<16x64xf32>
    %50 = arith.addf %46, %49 : vector<16x64xf32>
    %c7 = arith.constant 7 : index
    %c0_37 = arith.constant 0 : index
    %51 = vector.load %arg4[%c7, %c0_37] : memref<32x64xf32, #tpu.memory_space<vmem>>, vector<1x64xf32>
    %52 = vector.broadcast %51 : vector<1x64xf32> to vector<16x64xf32>
    %53 = arith.mulf %52, %12 : vector<16x64xf32>
    %54 = arith.addf %50, %53 : vector<16x64xf32>
    %cst_38 = arith.constant 0.00999999977 : f32
    %55 = vector.broadcast %cst_38 : f32 to vector<16x64xf32>
    %56 = arith.mulf %55, %54 : vector<16x64xf32>
    %57 = arith.maximumf %54, %56 : vector<16x64xf32>
    %c0_39 = arith.constant 0 : index
    %c1_40 = arith.constant 1 : index
    %c0_41 = arith.constant 0 : index
    %c0_42 = arith.constant 0 : index
    %58 = vector.load %arg6[%c0_39, %c1_40, %c0_41, %c0_42] : memref<1x8x16x64xf32, #tpu.memory_space<vmem>>, vector<1x1x16x64xf32>
    %59 = vector.shape_cast %58 : vector<1x1x16x64xf32> to vector<16x64xf32>
    %60 = vector.shape_cast %57 : vector<16x64xf32> to vector<1x1x16x64xf32>
    tpu.vector_store %arg6[%c0_39, %c1_40, %c0_41, %c0_42], %60 {strides = array<i32>} : memref<1x8x16x64xf32, #tpu.memory_space<vmem>>, vector<1x1x16x64xf32>,
    %c2_43 = arith.constant 2 : index
    %c0_44 = arith.constant 0 : index
    %61 = vector.load %arg5[%c2_43, %c0_44] : memref<8x64xf32, #tpu.memory_space<vmem>>, vector<1x64xf32>
    %c8 = arith.constant 8 : index
    %c0_45 = arith.constant 0 : index
    %62 = vector.load %arg4[%c8, %c0_45] : memref<32x64xf32, #tpu.memory_space<vmem>>, vector<1x64xf32>
    %63 = vector.broadcast %62 : vector<1x64xf32> to vector<16x64xf32>
    %64 = arith.mulf %63, %3 : vector<16x64xf32>
    %65 = vector.broadcast %61 : vector<1x64xf32> to vector<16x64xf32>
    %66 = arith.addf %65, %64 : vector<16x64xf32>
    %c9 = arith.constant 9 : index
    %c0_46 = arith.constant 0 : index
    %67 = vector.load %arg4[%c9, %c0_46] : memref<32x64xf32, #tpu.memory_space<vmem>>, vector<1x64xf32>
    %68 = vector.broadcast %67 : vector<1x64xf32> to vector<16x64xf32>
    %69 = arith.mulf %68, %6 : vector<16x64xf32>
    %70 = arith.addf %66, %69 : vector<16x64xf32>
    %c10 = arith.constant 10 : index
    %c0_47 = arith.constant 0 : index
    %71 = vector.load %arg4[%c10, %c0_47] : memref<32x64xf32, #tpu.memory_space<vmem>>, vector<1x64xf32>
    %72 = vector.broadcast %71 : vector<1x64xf32> to vector<16x64xf32>
    %73 = arith.mulf %72, %9 : vector<16x64xf32>
    %74 = arith.addf %70, %73 : vector<16x64xf32>
    %c11 = arith.constant 11 : index
    %c0_48 = arith.constant 0 : index
    %75 = vector.load %arg4[%c11, %c0_48] : memref<32x64xf32, #tpu.memory_space<vmem>>, vector<1x64xf32>
    %76 = vector.broadcast %75 : vector<1x64xf32> to vector<16x64xf32>
    %77 = arith.mulf %76, %12 : vector<16x64xf32>
    %78 = arith.addf %74, %77 : vector<16x64xf32>
    %cst_49 = arith.constant 0.00999999977 : f32
    %79 = vector.broadcast %cst_49 : f32 to vector<16x64xf32>
    %80 = arith.mulf %79, %78 : vector<16x64xf32>
    %81 = arith.maximumf %78, %80 : vector<16x64xf32>
    %c0_50 = arith.constant 0 : index
    %c2_51 = arith.constant 2 : index
    %c0_52 = arith.constant 0 : index
    %c0_53 = arith.constant 0 : index
    %82 = vector.load %arg6[%c0_50, %c2_51, %c0_52, %c0_53] : memref<1x8x16x64xf32, #tpu.memory_space<vmem>>, vector<1x1x16x64xf32>
    %83 = vector.shape_cast %82 : vector<1x1x16x64xf32> to vector<16x64xf32>
    %84 = vector.shape_cast %81 : vector<16x64xf32> to vector<1x1x16x64xf32>
    tpu.vector_store %arg6[%c0_50, %c2_51, %c0_52, %c0_53], %84 {strides = array<i32>} : memref<1x8x16x64xf32, #tpu.memory_space<vmem>>, vector<1x1x16x64xf32>,
    %c3_54 = arith.constant 3 : index
    %c0_55 = arith.constant 0 : index
    %85 = vector.load %arg5[%c3_54, %c0_55] : memref<8x64xf32, #tpu.memory_space<vmem>>, vector<1x64xf32>
    %c12 = arith.constant 12 : index
    %c0_56 = arith.constant 0 : index
    %86 = vector.load %arg4[%c12, %c0_56] : memref<32x64xf32, #tpu.memory_space<vmem>>, vector<1x64xf32>
    %87 = vector.broadcast %86 : vector<1x64xf32> to vector<16x64xf32>
    %88 = arith.mulf %87, %3 : vector<16x64xf32>
    %89 = vector.broadcast %85 : vector<1x64xf32> to vector<16x64xf32>
    %90 = arith.addf %89, %88 : vector<16x64xf32>
    %c13 = arith.constant 13 : index
    %c0_57 = arith.constant 0 : index
    %91 = vector.load %arg4[%c13, %c0_57] : memref<32x64xf32, #tpu.memory_space<vmem>>, vector<1x64xf32>
    %92 = vector.broadcast %91 : vector<1x64xf32> to vector<16x64xf32>
    %93 = arith.mulf %92, %6 : vector<16x64xf32>
    %94 = arith.addf %90, %93 : vector<16x64xf32>
    %c14 = arith.constant 14 : index
    %c0_58 = arith.constant 0 : index
    %95 = vector.load %arg4[%c14, %c0_58] : memref<32x64xf32, #tpu.memory_space<vmem>>, vector<1x64xf32>
    %96 = vector.broadcast %95 : vector<1x64xf32> to vector<16x64xf32>
    %97 = arith.mulf %96, %9 : vector<16x64xf32>
    %98 = arith.addf %94, %97 : vector<16x64xf32>
    %c15 = arith.constant 15 : index
    %c0_59 = arith.constant 0 : index
    %99 = vector.load %arg4[%c15, %c0_59] : memref<32x64xf32, #tpu.memory_space<vmem>>, vector<1x64xf32>
    %100 = vector.broadcast %99 : vector<1x64xf32> to vector<16x64xf32>
    %101 = arith.mulf %100, %12 : vector<16x64xf32>
    %102 = arith.addf %98, %101 : vector<16x64xf32>
    %cst_60 = arith.constant 0.00999999977 : f32
    %103 = vector.broadcast %cst_60 : f32 to vector<16x64xf32>
    %104 = arith.mulf %103, %102 : vector<16x64xf32>
    %105 = arith.maximumf %102, %104 : vector<16x64xf32>
    %c0_61 = arith.constant 0 : index
    %c3_62 = arith.constant 3 : index
    %c0_63 = arith.constant 0 : index
    %c0_64 = arith.constant 0 : index
    %106 = vector.load %arg6[%c0_61, %c3_62, %c0_63, %c0_64] : memref<1x8x16x64xf32, #tpu.memory_space<vmem>>, vector<1x1x16x64xf32>
    %107 = vector.shape_cast %106 : vector<1x1x16x64xf32> to vector<16x64xf32>
    %108 = vector.shape_cast %105 : vector<16x64xf32> to vector<1x1x16x64xf32>
    tpu.vector_store %arg6[%c0_61, %c3_62, %c0_63, %c0_64], %108 {strides = array<i32>} : memref<1x8x16x64xf32, #tpu.memory_space<vmem>>, vector<1x1x16x64xf32>,
    %c4_65 = arith.constant 4 : index
    %c0_66 = arith.constant 0 : index
    %109 = vector.load %arg5[%c4_65, %c0_66] : memref<8x64xf32, #tpu.memory_space<vmem>>, vector<1x64xf32>
    %c16 = arith.constant 16 : index
    %c0_67 = arith.constant 0 : index
    %110 = vector.load %arg4[%c16, %c0_67] : memref<32x64xf32, #tpu.memory_space<vmem>>, vector<1x64xf32>
    %111 = vector.broadcast %110 : vector<1x64xf32> to vector<16x64xf32>
    %112 = arith.mulf %111, %3 : vector<16x64xf32>
    %113 = vector.broadcast %109 : vector<1x64xf32> to vector<16x64xf32>
    %114 = arith.addf %113, %112 : vector<16x64xf32>
    %c17 = arith.constant 17 : index
    %c0_68 = arith.constant 0 : index
    %115 = vector.load %arg4[%c17, %c0_68] : memref<32x64xf32, #tpu.memory_space<vmem>>, vector<1x64xf32>
    %116 = vector.broadcast %115 : vector<1x64xf32> to vector<16x64xf32>
    %117 = arith.mulf %116, %6 : vector<16x64xf32>
    %118 = arith.addf %114, %117 : vector<16x64xf32>
    %c18 = arith.constant 18 : index
    %c0_69 = arith.constant 0 : index
    %119 = vector.load %arg4[%c18, %c0_69] : memref<32x64xf32, #tpu.memory_space<vmem>>, vector<1x64xf32>
    %120 = vector.broadcast %119 : vector<1x64xf32> to vector<16x64xf32>
    %121 = arith.mulf %120, %9 : vector<16x64xf32>
    %122 = arith.addf %118, %121 : vector<16x64xf32>
    %c19 = arith.constant 19 : index
    %c0_70 = arith.constant 0 : index
    %123 = vector.load %arg4[%c19, %c0_70] : memref<32x64xf32, #tpu.memory_space<vmem>>, vector<1x64xf32>
    %124 = vector.broadcast %123 : vector<1x64xf32> to vector<16x64xf32>
    %125 = arith.mulf %124, %12 : vector<16x64xf32>
    %126 = arith.addf %122, %125 : vector<16x64xf32>
    %cst_71 = arith.constant 0.00999999977 : f32
    %127 = vector.broadcast %cst_71 : f32 to vector<16x64xf32>
    %128 = arith.mulf %127, %126 : vector<16x64xf32>
    %129 = arith.maximumf %126, %128 : vector<16x64xf32>
    %c0_72 = arith.constant 0 : index
    %c4_73 = arith.constant 4 : index
    %c0_74 = arith.constant 0 : index
    %c0_75 = arith.constant 0 : index
    %130 = vector.load %arg6[%c0_72, %c4_73, %c0_74, %c0_75] : memref<1x8x16x64xf32, #tpu.memory_space<vmem>>, vector<1x1x16x64xf32>
    %131 = vector.shape_cast %130 : vector<1x1x16x64xf32> to vector<16x64xf32>
    %132 = vector.shape_cast %129 : vector<16x64xf32> to vector<1x1x16x64xf32>
    tpu.vector_store %arg6[%c0_72, %c4_73, %c0_74, %c0_75], %132 {strides = array<i32>} : memref<1x8x16x64xf32, #tpu.memory_space<vmem>>, vector<1x1x16x64xf32>,
    %c5_76 = arith.constant 5 : index
    %c0_77 = arith.constant 0 : index
    %133 = vector.load %arg5[%c5_76, %c0_77] : memref<8x64xf32, #tpu.memory_space<vmem>>, vector<1x64xf32>
    %c20 = arith.constant 20 : index
    %c0_78 = arith.constant 0 : index
    %134 = vector.load %arg4[%c20, %c0_78] : memref<32x64xf32, #tpu.memory_space<vmem>>, vector<1x64xf32>
    %135 = vector.broadcast %134 : vector<1x64xf32> to vector<16x64xf32>
    %136 = arith.mulf %135, %3 : vector<16x64xf32>
    %137 = vector.broadcast %133 : vector<1x64xf32> to vector<16x64xf32>
    %138 = arith.addf %137, %136 : vector<16x64xf32>
    %c21 = arith.constant 21 : index
    %c0_79 = arith.constant 0 : index
    %139 = vector.load %arg4[%c21, %c0_79] : memref<32x64xf32, #tpu.memory_space<vmem>>, vector<1x64xf32>
    %140 = vector.broadcast %139 : vector<1x64xf32> to vector<16x64xf32>
    %141 = arith.mulf %140, %6 : vector<16x64xf32>
    %142 = arith.addf %138, %141 : vector<16x64xf32>
    %c22 = arith.constant 22 : index
    %c0_80 = arith.constant 0 : index
    %143 = vector.load %arg4[%c22, %c0_80] : memref<32x64xf32, #tpu.memory_space<vmem>>, vector<1x64xf32>
    %144 = vector.broadcast %143 : vector<1x64xf32> to vector<16x64xf32>
    %145 = arith.mulf %144, %9 : vector<16x64xf32>
    %146 = arith.addf %142, %145 : vector<16x64xf32>
    %c23 = arith.constant 23 : index
    %c0_81 = arith.constant 0 : index
    %147 = vector.load %arg4[%c23, %c0_81] : memref<32x64xf32, #tpu.memory_space<vmem>>, vector<1x64xf32>
    %148 = vector.broadcast %147 : vector<1x64xf32> to vector<16x64xf32>
    %149 = arith.mulf %148, %12 : vector<16x64xf32>
    %150 = arith.addf %146, %149 : vector<16x64xf32>
    %cst_82 = arith.constant 0.00999999977 : f32
    %151 = vector.broadcast %cst_82 : f32 to vector<16x64xf32>
    %152 = arith.mulf %151, %150 : vector<16x64xf32>
    %153 = arith.maximumf %150, %152 : vector<16x64xf32>
    %c0_83 = arith.constant 0 : index
    %c5_84 = arith.constant 5 : index
    %c0_85 = arith.constant 0 : index
    %c0_86 = arith.constant 0 : index
    %154 = vector.load %arg6[%c0_83, %c5_84, %c0_85, %c0_86] : memref<1x8x16x64xf32, #tpu.memory_space<vmem>>, vector<1x1x16x64xf32>
    %155 = vector.shape_cast %154 : vector<1x1x16x64xf32> to vector<16x64xf32>
    %156 = vector.shape_cast %153 : vector<16x64xf32> to vector<1x1x16x64xf32>
    tpu.vector_store %arg6[%c0_83, %c5_84, %c0_85, %c0_86], %156 {strides = array<i32>} : memref<1x8x16x64xf32, #tpu.memory_space<vmem>>, vector<1x1x16x64xf32>,
    %c6_87 = arith.constant 6 : index
    %c0_88 = arith.constant 0 : index
    %157 = vector.load %arg5[%c6_87, %c0_88] : memref<8x64xf32, #tpu.memory_space<vmem>>, vector<1x64xf32>
    %c24 = arith.constant 24 : index
    %c0_89 = arith.constant 0 : index
    %158 = vector.load %arg4[%c24, %c0_89] : memref<32x64xf32, #tpu.memory_space<vmem>>, vector<1x64xf32>
    %159 = vector.broadcast %158 : vector<1x64xf32> to vector<16x64xf32>
    %160 = arith.mulf %159, %3 : vector<16x64xf32>
    %161 = vector.broadcast %157 : vector<1x64xf32> to vector<16x64xf32>
    %162 = arith.addf %161, %160 : vector<16x64xf32>
    %c25 = arith.constant 25 : index
    %c0_90 = arith.constant 0 : index
    %163 = vector.load %arg4[%c25, %c0_90] : memref<32x64xf32, #tpu.memory_space<vmem>>, vector<1x64xf32>
    %164 = vector.broadcast %163 : vector<1x64xf32> to vector<16x64xf32>
    %165 = arith.mulf %164, %6 : vector<16x64xf32>
    %166 = arith.addf %162, %165 : vector<16x64xf32>
    %c26 = arith.constant 26 : index
    %c0_91 = arith.constant 0 : index
    %167 = vector.load %arg4[%c26, %c0_91] : memref<32x64xf32, #tpu.memory_space<vmem>>, vector<1x64xf32>
    %168 = vector.broadcast %167 : vector<1x64xf32> to vector<16x64xf32>
    %169 = arith.mulf %168, %9 : vector<16x64xf32>
    %170 = arith.addf %166, %169 : vector<16x64xf32>
    %c27 = arith.constant 27 : index
    %c0_92 = arith.constant 0 : index
    %171 = vector.load %arg4[%c27, %c0_92] : memref<32x64xf32, #tpu.memory_space<vmem>>, vector<1x64xf32>
    %172 = vector.broadcast %171 : vector<1x64xf32> to vector<16x64xf32>
    %173 = arith.mulf %172, %12 : vector<16x64xf32>
    %174 = arith.addf %170, %173 : vector<16x64xf32>
    %cst_93 = arith.constant 0.00999999977 : f32
    %175 = vector.broadcast %cst_93 : f32 to vector<16x64xf32>
    %176 = arith.mulf %175, %174 : vector<16x64xf32>
    %177 = arith.maximumf %174, %176 : vector<16x64xf32>
    %c0_94 = arith.constant 0 : index
    %c6_95 = arith.constant 6 : index
    %c0_96 = arith.constant 0 : index
    %c0_97 = arith.constant 0 : index
    %178 = vector.load %arg6[%c0_94, %c6_95, %c0_96, %c0_97] : memref<1x8x16x64xf32, #tpu.memory_space<vmem>>, vector<1x1x16x64xf32>
    %179 = vector.shape_cast %178 : vector<1x1x16x64xf32> to vector<16x64xf32>
    %180 = vector.shape_cast %177 : vector<16x64xf32> to vector<1x1x16x64xf32>
    tpu.vector_store %arg6[%c0_94, %c6_95, %c0_96, %c0_97], %180 {strides = array<i32>} : memref<1x8x16x64xf32, #tpu.memory_space<vmem>>, vector<1x1x16x64xf32>,
    %c7_98 = arith.constant 7 : index
    %c0_99 = arith.constant 0 : index
    %181 = vector.load %arg5[%c7_98, %c0_99] : memref<8x64xf32, #tpu.memory_space<vmem>>, vector<1x64xf32>
    %c28 = arith.constant 28 : index
    %c0_100 = arith.constant 0 : index
    %182 = vector.load %arg4[%c28, %c0_100] : memref<32x64xf32, #tpu.memory_space<vmem>>, vector<1x64xf32>
    %183 = vector.broadcast %182 : vector<1x64xf32> to vector<16x64xf32>
    %184 = arith.mulf %183, %3 : vector<16x64xf32>
    %185 = vector.broadcast %181 : vector<1x64xf32> to vector<16x64xf32>
    %186 = arith.addf %185, %184 : vector<16x64xf32>
    %c29 = arith.constant 29 : index
    %c0_101 = arith.constant 0 : index
    %187 = vector.load %arg4[%c29, %c0_101] : memref<32x64xf32, #tpu.memory_space<vmem>>, vector<1x64xf32>
    %188 = vector.broadcast %187 : vector<1x64xf32> to vector<16x64xf32>
    %189 = arith.mulf %188, %6 : vector<16x64xf32>
    %190 = arith.addf %186, %189 : vector<16x64xf32>
    %c30 = arith.constant 30 : index
    %c0_102 = arith.constant 0 : index
    %191 = vector.load %arg4[%c30, %c0_102] : memref<32x64xf32, #tpu.memory_space<vmem>>, vector<1x64xf32>
    %192 = vector.broadcast %191 : vector<1x64xf32> to vector<16x64xf32>
    %193 = arith.mulf %192, %9 : vector<16x64xf32>
    %194 = arith.addf %190, %193 : vector<16x64xf32>
    %c31 = arith.constant 31 : index
    %c0_103 = arith.constant 0 : index
    %195 = vector.load %arg4[%c31, %c0_103] : memref<32x64xf32, #tpu.memory_space<vmem>>, vector<1x64xf32>
    %196 = vector.broadcast %195 : vector<1x64xf32> to vector<16x64xf32>
    %197 = arith.mulf %196, %12 : vector<16x64xf32>
    %198 = arith.addf %194, %197 : vector<16x64xf32>
    %cst_104 = arith.constant 0.00999999977 : f32
    %199 = vector.broadcast %cst_104 : f32 to vector<16x64xf32>
    %200 = arith.mulf %199, %198 : vector<16x64xf32>
    %201 = arith.maximumf %198, %200 : vector<16x64xf32>
    %c0_105 = arith.constant 0 : index
    %c7_106 = arith.constant 7 : index
    %c0_107 = arith.constant 0 : index
    %c0_108 = arith.constant 0 : index
    %202 = vector.load %arg6[%c0_105, %c7_106, %c0_107, %c0_108] : memref<1x8x16x64xf32, #tpu.memory_space<vmem>>, vector<1x1x16x64xf32>
    %203 = vector.shape_cast %202 : vector<1x1x16x64xf32> to vector<16x64xf32>
    %204 = vector.shape_cast %201 : vector<16x64xf32> to vector<1x1x16x64xf32>
    tpu.vector_store %arg6[%c0_105, %c7_106, %c0_107, %c0_108], %204 {strides = array<i32>} : memref<1x8x16x64xf32, #tpu.memory_space<vmem>>, vector<1x1x16x64xf32>,
    return
  }
  func.func @transform_0(%arg0: i32, %arg1: i32) -> (i32, i32, i32, i32) {
    %c0_i32 = arith.constant 0 : i32
    %c0_i32_0 = arith.constant 0 : i32
    %c0_i32_1 = arith.constant 0 : i32
    return %arg0, %c0_i32, %arg1, %c0_i32_0 : i32, i32, i32, i32
  }
  func.func @transform_1(%arg0: i32, %arg1: i32) -> (i32, i32) {
    %c0_i32 = arith.constant 0 : i32
    %c0_i32_0 = arith.constant 0 : i32
    %c0_i32_1 = arith.constant 0 : i32
    return %c0_i32, %c0_i32_0 : i32, i32
  }
  func.func @transform_2(%arg0: i32, %arg1: i32) -> (i32, i32) {
    %c0_i32 = arith.constant 0 : i32
    %c0_i32_0 = arith.constant 0 : i32
    %c0_i32_1 = arith.constant 0 : i32
    return %c0_i32, %c0_i32_0 : i32, i32
  }
  func.func @transform_3(%arg0: i32, %arg1: i32) -> (i32, i32) {
    %c0_i32 = arith.constant 0 : i32
    %c0_i32_0 = arith.constant 0 : i32
    %c0_i32_1 = arith.constant 0 : i32
    return %c0_i32, %c0_i32_0 : i32, i32
  }
  func.func @transform_4(%arg0: i32, %arg1: i32) -> (i32, i32, i32, i32) {
    %c0_i32 = arith.constant 0 : i32
    %c0_i32_0 = arith.constant 0 : i32
    %c0_i32_1 = arith.constant 0 : i32
    return %arg0, %c0_i32, %arg1, %c0_i32_0 : i32, i32, i32, i32
  }
}

</mosaic_0001>

<llo_original>
// kernel: tpu_custom_call.1
$region0: #{tpu_custom_call.1}
  #allocation0 [shape = 'u32[]', space=smem, size = 0x4, offset = 0x4, fixed_abs, tag = 'smem constant byte address 0x4 - core index']
  #allocation1 [shape = 'u32[144,128]{1,0:T(1,128)}', space=vmem, size = 0x12000, scoped, tag = 'internal scratch']
  %s0 = inlined_call_operand.hbm [shape: f32[2,4,16,16], index: 0, kind: input, shape index: {}]
  %s1 = inlined_call_operand.hbm [shape: f32[16,64], index: 1, kind: input, shape index: {}]
  %s2 = inlined_call_operand.hbm [shape: f32[32,64], index: 2, kind: input, shape index: {}]
  %s3 = inlined_call_operand.vmem [shape: f32[8,64], index: 3, kind: input, shape index: {}]
  %s4 = inlined_call_operand.hbm [shape: f32[2,8,16,64], index: 4, kind: output, shape index: {}]
  %s5 = sld [smem:[#allocation0]]
  $region61: #{tpu_custom_call.1} parent=0
    _
  %s7 = ssub.s32 1, %s5
  %s8 = scalar_select 0, %s7, %s5
  $region1: #{tpu_custom_call.1} parent=0
    #allocation2 [shape = 'u8[65536]{0}', space=vmem, size = 0x10000, scoped, tag = 'input window, operand 0']
    #allocation3 [shape = 's32[2]{0}', space=sflag, size = 0x8, scoped, tag = 'scoped memory for tpu_custom_call.1']
    #allocation4 [shape = 's32[2]{0}', space=sflag, size = 0x8, scoped, tag = 'scoped memory for tpu_custom_call.1']
    #allocation5 [shape = 'u8[8192]{0}', space=vmem, size = 0x2000, scoped, tag = 'input window, operand 1, single buffered']
    #allocation6 [shape = 's32[1]{0}', space=sflag, size = 0x4, scoped, tag = 'scoped memory for tpu_custom_call.1']
    #allocation7 [shape = 'u8[16384]{0}', space=vmem, size = 0x4000, scoped, tag = 'input window, operand 2, single buffered']
    #allocation8 [shape = 'u8[131072]{0}', space=vmem, size = 0x20000, scoped, tag = 'output window, operand 0']
    %9 = vsyncpa [#allocation3], 0
    %s10 = scalar_lea.sflag [#allocation3], 1
    %11 = vsyncpa %s10, 0
    %12 = vsyncpa [#allocation6], 0
    %13 = vsyncpa [#allocation4], 0
    %s14 = scalar_lea.sflag [#allocation4], 1
    %15 = vsyncpa %s14, 0
    loop: start=0, step=1, limit=4
    $region2: #{tpu_custom_call.1} parent=1 // loop_pre_header
      _
    $region3: #{tpu_custom_call.1} parent=1 // loop_header
      %s17 = sphi 0, %s21
      %p18 = scmp.ge.s32.totalorder %s17, 4
      %s24 = sphi 0, %s36
      %s25 = sphi 0, %s32
      %s26 = sphi 0, %s24
      %s27 = sphi 0, %s25
      %s28 = sphi 0, %s26
      %s29 = sphi 0, %s27
      %s41 = sphi 0, %s43
      %s44 = sphi 0, %s41
      %s45 = sphi 0, %s44
      %s61 = sphi 0, %s45
      %s65 = sphi 0, %s65
      %s67 = sphi 0, %s65
      %s68 = sphi 0, %s67
      %s82 = sphi 0, %s68
      %s86 = sphi 0, %s86
      %s88 = sphi 0, %s86
      %s89 = sphi 0, %s88
      %s103 = sphi 0, %s89
      %s107 = sphi 0, %s107
      %s109 = sphi 0, %s107
      %s110 = sphi 0, %s109
      %s124 = sphi 0, %s110
      %s132 = sphi 0, %s134
      %s135 = sphi 0, %s132
      %s136 = sphi 0, %s135
      %s152 = sphi 0, %s136
    $region4: #{tpu_custom_call.1} parent=1 // loop_header_branch
      %20 = sbr.rel (%p18) target = $region8
    $region5: #{tpu_custom_call.1} parent=1 // loop_body
      %s22 = ssub.s32 %s17, 1
      %s23 = ssub.s32 %s17, 2
      %s30 = sadd.s32 1, %s25
      %p31 = scmp.ge.s32.totalorder %s30, 1
      %s32 = scalar_select %p31, 0, %s30
      %s33 = sadd.s32 1, %s24
      %s34 = scalar_select %p31, %s33, %s24
      %p35 = scmp.ge.s32.totalorder %s34, 2
      %s36 = scalar_select %p35, 0, %s34
      %s37 = ssub.s32 %s24, %s36
      %s38 = ssub.s32 %s25, %s32
      %s39 = sor.u32 %s37, %s38
      %p40 = scmp.eq.s32.totalorder %s39, 0
      %s42 = sadd.s32 %s41, 1
      %s43 = scalar_select %p40, %s41, %s42
      %p46 = pneg %p40
      %p47 = scmp.eq.s32.totalorder %s17, 1
      %p48 = por %p46, %p47
      %p49 = scmp.ne.s32.totalorder %s41, %s44
      %p50 = scmp.eq.s32.totalorder %s17, 0
      %p51 = por %p49, %p50
      %p52 = scmp.ne.s32.totalorder %s41, %s44
      %p53 = scmp.eq.s32.totalorder %s22, 1
      %p54 = por %p52, %p53
      %p55 = scmp.ne.s32.totalorder %s44, %s45
      %p56 = scmp.eq.s32.totalorder %s22, 0
      %p57 = por %p55, %p56
      %p58 = scmp.ne.s32.totalorder %s44, %s45
      %p59 = scmp.eq.s32.totalorder %s23, 1
      %p60 = por %p58, %p59
      %p62 = scmp.ne.s32.totalorder %s45, %s61
      %p63 = scmp.eq.s32.totalorder %s23, 0
      %p64 = por %p62, %p63
      %s66 = sadd.s32 %s65, 1
      %p69 = scmp.eq.s32.totalorder %s17, 1
      %p70 = scmp.ne.s32.totalorder %s65, %s67
      %p71 = scmp.eq.s32.totalorder %s17, 0
      %p72 = por %p70, %p71
      %p73 = scmp.ne.s32.totalorder %s65, %s67
      %p74 = scmp.eq.s32.totalorder %s22, 1
      %p75 = por %p73, %p74
      %p76 = scmp.ne.s32.totalorder %s67, %s68
      %p77 = scmp.eq.s32.totalorder %s22, 0
      %p78 = por %p76, %p77
      %p79 = scmp.ne.s32.totalorder %s67, %s68
      %p80 = scmp.eq.s32.totalorder %s23, 1
      %p81 = por %p79, %p80
      %p83 = scmp.ne.s32.totalorder %s68, %s82
      %p84 = scmp.eq.s32.totalorder %s23, 0
      %p85 = por %p83, %p84
      %s87 = sadd.s32 %s86, 1
      %p90 = scmp.eq.s32.totalorder %s17, 1
      %p91 = scmp.ne.s32.totalorder %s86, %s88
      %p92 = scmp.eq.s32.totalorder %s17, 0
      %p93 = por %p91, %p92
      %p94 = scmp.ne.s32.totalorder %s86, %s88
      %p95 = scmp.eq.s32.totalorder %s22, 1
      %p96 = por %p94, %p95
      %p97 = scmp.ne.s32.totalorder %s88, %s89
      %p98 = scmp.eq.s32.totalorder %s22, 0
      %p99 = por %p97, %p98
      %p100 = scmp.ne.s32.totalorder %s88, %s89
      %p101 = scmp.eq.s32.totalorder %s23, 1
      %p102 = por %p100, %p101
      %p104 = scmp.ne.s32.totalorder %s89, %s103
      %p105 = scmp.eq.s32.totalorder %s23, 0
      %p106 = por %p104, %p105
      %s108 = sadd.s32 %s107, 1
      %p111 = scmp.eq.s32.totalorder %s17, 1
      %p112 = scmp.ne.s32.totalorder %s107, %s109
      %p113 = scmp.eq.s32.totalorder %s17, 0
      %p114 = por %p112, %p113
      %p115 = scmp.ne.s32.totalorder %s107, %s109
      %p116 = scmp.eq.s32.totalorder %s22, 1
      %p117 = por %p115, %p116
      %p118 = scmp.ne.s32.totalorder %s109, %s110
      %p119 = scmp.eq.s32.totalorder %s22, 0
      %p120 = por %p118, %p119
      %p121 = scmp.ne.s32.totalorder %s109, %s110
      %p122 = scmp.eq.s32.totalorder %s23, 1
      %p123 = por %p121, %p122
      %p125 = scmp.ne.s32.totalorder %s110, %s124
      %p126 = scmp.eq.s32.totalorder %s23, 0
      %p127 = por %p125, %p126
      %s128 = ssub.s32 %s24, %s36
      %s129 = ssub.s32 %s25, %s32
      %s130 = sor.u32 %s128, %s129
      %p131 = scmp.eq.s32.totalorder %s130, 0
      %s133 = sadd.s32 %s132, 1
      %s134 = scalar_select %p131, %s132, %s133
      %p137 = pneg %p131
      %p138 = scmp.eq.s32.totalorder %s17, 1
      %p139 = por %p137, %p138
      %p140 = scmp.ne.s32.totalorder %s132, %s135
      %p141 = scmp.eq.s32.totalorder %s17, 0
      %p142 = por %p140, %p141
      %p143 = scmp.ne.s32.totalorder %s132, %s135
      %p144 = scmp.eq.s32.totalorder %s22, 1
      %p145 = por %p143, %p144
      %p146 = scmp.ne.s32.totalorder %s135, %s136
      %p147 = scmp.eq.s32.totalorder %s22, 0
      %p148 = por %p146, %p147
      %p149 = scmp.ne.s32.totalorder %s135, %s136
      %p150 = scmp.eq.s32.totalorder %s23, 1
      %p151 = por %p149, %p150
      %p153 = scmp.ne.s32.totalorder %s136, %s152
      %p154 = scmp.eq.s32.totalorder %s23, 0
      %p155 = por %p153, %p154
      %p156 = scmp.le.s32.totalorder 1, %s17
      %p157 = scmp.lt.s32.totalorder %s17, 3
      %p158 = pnand %p156, %p157
      %p159 = pneg %p158
      // Predicated region
      $region9: #{tpu_custom_call.1} parent=5 // pred_check
        _
      $region10: #{tpu_custom_call.1} parent=5 // pred_check_branch
        %161 = sbr.rel (%p158) target = $region12
      $region11: #{tpu_custom_call.1} parent=5 // pred_region
        %s162 = ssub.s32 %s17, 1
        // Predicated region
        $region13: #{tpu_custom_call.1} parent=11 // pred_check
          %p163 = pneg %p78
        $region14: #{tpu_custom_call.1} parent=11 // pred_check_branch
          %165 = sbr.rel (%p163) target = $region16
        $region15: #{tpu_custom_call.1} parent=11 // pred_region
          %s167 = ssub.s32 256, 256
          %168 = vsyncadd [#allocation6], %s167
          %s169 = sshll.u32 [#allocation5], 4
          %s170 = int_to_ptr.vmem [resolvable:$true] %s169
          %175 = dma.hbm_to_vmem [thread:$0]  %s1, 256, %s170, [#allocation6], 128, 128, 8
        $region16: #{tpu_custom_call.1} parent=11 // pred_fallthru
          _
        // Predicated region
        $region17: #{tpu_custom_call.1} parent=11 // pred_check
          %p176 = pneg %p99
        $region18: #{tpu_custom_call.1} parent=11 // pred_check_branch
          %178 = sbr.rel (%p176) target = $region20
        $region19: #{tpu_custom_call.1} parent=11 // pred_region
          %s180 = ssub.s32 512, 512
          %181 = vsyncadd [#allocation6], %s180
          %s182 = sshll.u32 [#allocation7], 4
          %s183 = int_to_ptr.vmem [resolvable:$true] %s182
          %188 = dma.hbm_to_vmem [thread:$0]  %s2, 512, %s183, [#allocation6], 128, 128, 8
        $region20: #{tpu_custom_call.1} parent=11 // pred_fallthru
          _
        // Predicated region
        $region21: #{tpu_custom_call.1} parent=11 // pred_check
          %p189 = pneg %p120
        $region22: #{tpu_custom_call.1} parent=11 // pred_check_branch
          %191 = sbr.rel (%p189) target = $region24
        $region23: #{tpu_custom_call.1} parent=11 // pred_region
          _
        $region24: #{tpu_custom_call.1} parent=11 // pred_fallthru
          _
      $region12: #{tpu_custom_call.1} parent=5 // pred_fallthru
        _
      %p192 = scmp.lt.s32.totalorder %s17, 2
      // Predicated region
      $region25: #{tpu_custom_call.1} parent=5 // pred_check
        %p193 = pneg %p192
      $region26: #{tpu_custom_call.1} parent=5 // pred_check_branch
        %195 = sbr.rel (%p193) target = $region28
      $region27: #{tpu_custom_call.1} parent=5 // pred_region
        // Predicated region
        $region29: #{tpu_custom_call.1} parent=27 // pred_check
          %p196 = pneg %p51
        $region30: #{tpu_custom_call.1} parent=27 // pred_check_branch
          %198 = sbr.rel (%p196) target = $region32
        $region31: #{tpu_custom_call.1} parent=27 // pred_region
          %s199 = sand.u32 %s41, 1
          %s200 = scalar_lea.sflag [#allocation3], %s199
          %s201 = sand.u32 %s41, 1
          %s202 = smul.addr %s201, 64
          %s203 = scalar_lea.vmem [#allocation2], %s202
          %s204 = smul.u32 2, %s25
          %s206 = ssub.s32 1024, 1024
          %207 = vsyncadd %s200, %s206
          %s208 = smul.addr %s24, 8
          %s209 = sadd.s32 %s204, %s208
          %s210 = smul.addr %s209, 128
          %s211 = scalar_lea.hbm %s0, %s210
          %s212 = sshll.u32 %s203, 4
          %s213 = int_to_ptr.vmem [resolvable:$true] %s212
          %218 = dma.hbm_to_vmem [thread:$0]  %s211, 1024, %s213, %s200, 128, 128, 8
        $region32: #{tpu_custom_call.1} parent=27 // pred_fallthru
          _
      $region28: #{tpu_custom_call.1} parent=5 // pred_fallthru
        _
      %p219 = scmp.le.s32.totalorder 1, %s17
      %p220 = scmp.lt.s32.totalorder %s17, 3
      %p221 = pnand %p219, %p220
      %p222 = pneg %p221
      // Predicated region
      $region33: #{tpu_custom_call.1} parent=5 // pred_check
        _
      $region34: #{tpu_custom_call.1} parent=5 // pred_check_branch
        %224 = sbr.rel (%p221) target = $region36
      $region35: #{tpu_custom_call.1} parent=5 // pred_region
        %s225 = ssub.s32 %s17, 1
        %s226 = sand.u32 %s44, 1
        %s227 = scalar_lea.sflag [#allocation3], %s226
        %s228 = sand.u32 %s44, 1
        %s229 = smul.addr %s228, 64
        %s230 = scalar_lea.vmem [#allocation2], %s229
        // Predicated region
        $region37: #{tpu_custom_call.1} parent=35 // pred_check
          %p231 = pneg %p57
        $region38: #{tpu_custom_call.1} parent=35 // pred_check_branch
          %233 = sbr.rel (%p231) target = $region40
        $region39: #{tpu_custom_call.1} parent=35 // pred_region
          %234 = dma.done %s227, 1024
        $region40: #{tpu_custom_call.1} parent=35 // pred_fallthru
          _
        // Predicated region
        $region41: #{tpu_custom_call.1} parent=35 // pred_check
          %p235 = pneg %p78
        $region42: #{tpu_custom_call.1} parent=35 // pred_check_branch
          %237 = sbr.rel (%p235) target = $region44
        $region43: #{tpu_custom_call.1} parent=35 // pred_region
          %238 = dma.done [#allocation6], 256
        $region44: #{tpu_custom_call.1} parent=35 // pred_fallthru
          _
        // Predicated region
        $region45: #{tpu_custom_call.1} parent=35 // pred_check
          %p239 = pneg %p99
        $region46: #{tpu_custom_call.1} parent=35 // pred_check_branch
          %241 = sbr.rel (%p239) target = $region48
        $region47: #{tpu_custom_call.1} parent=35 // pred_region
          %242 = dma.done [#allocation6], 512
        $region48: #{tpu_custom_call.1} parent=35 // pred_fallthru
          _
        %s243 = sand.u32 %s44, 1
        %s244 = scalar_lea.sflag [#allocation3], %s243
        %s245 = sand.u32 %s44, 1
        %s246 = smul.addr %s245, 64
        %s247 = scalar_lea.vmem [#allocation2], %s246
        %p248 = pneg %p57
        %p249 = pneg %p54
        %p250 = pneg %p78
        %p251 = pneg %p75
        %p252 = pneg %p99
        %p253 = pneg %p96
        %p254 = pneg %p120
        %p255 = pneg %p117
        %p256 = pneg %p148
        %p257 = pneg %p145
        %s258 = sand.u32 %s135, 1
        %s259 = scalar_lea.sflag [#allocation4], %s258
        %s260 = sand.u32 %s135, 1
        %s261 = smul.addr %s260, 128
        %s262 = scalar_lea.vmem [#allocation8], %s261
        %s263 = smul.u32 2, %s27
        %s264 = smul.u32 2, %s27
        %v265 = vld [vmem:[#allocation5] sm:$0xff]
        %v266 = vld [vmem:[#allocation5 + $0x8] sm:$0xff]
        %v267 = vld [vmem:[%s230] sm:$0xff]
        %v268 = vld [vmem:[%s230 + $0x8] sm:$0xff]
        %vm269 = vcmask 130048
        %v271 = vsel %vm269, %v267, 0
        %v274 = vsel %vm269, %v268, 0
        %276 = vmatprep.subr.mxu0 0.0
        %277 = vmatpush1.msra.mxu0 %v265
        %278 = vmatprep.subr.mxu0 0.0
        %279 = vmatpush1.msra.mxu0 %v266
        %280 = vmatprep.subr.mxu0 0.0
        %281 = vmatpush1.msra.mxu0 0.0
        %282 = vmatprep.subr.mxu0 0.0
        %283 = vmatpush1.msra.mxu0 0.0
        %284 = vmatprep.subr.mxu0 0.0
        %285 = vmatpush1.msra.mxu0 0.0
        %286 = vmatprep.subr.mxu0 0.0
        %287 = vmatpush1.msra.mxu0 0.0
        %288 = vmatprep.subr.mxu0 0.0
        %289 = vmatpush1.msra.mxu0 0.0
        %290 = vmatprep.subr.mxu0 0.0
        %291 = vmatpush1.msra.mxu0 0.0
        %292 = vmatprep.subr.mxu0 0.0
        %293 = vmatpush1.msra.mxu0 0.0
        %294 = vmatprep.subr.mxu0 0.0
        %295 = vmatpush1.msra.mxu0 0.0
        %296 = vmatprep.subr.mxu0 0.0
        %297 = vmatpush1.msra.mxu0 0.0
        %298 = vmatprep.subr.mxu0 0.0
        %299 = vmatpush1.msra.mxu0 0.0
        %300 = vmatprep.subr.mxu0 0.0
        %301 = vmatpush1.msra.mxu0 0.0
        %302 = vmatprep.subr.mxu0 0.0
        %303 = vmatpush1.msra.mxu0 0.0
        %304 = vmatprep.subr.mxu0 0.0
        %305 = vmatpush1.msra.mxu0 0.0
        %306 = vmatprep.subr.mxu0 0.0
        %307 = vmatpush1.msra.mxu0 0.0
        %308 = vmatprep.subr.mxu0 0.0
        %309 = vmatpush1.msra.mxu0 0.0
        %310 = vmatprep.subr.mxu0 0.0
        %311 = vmatpush1.msra.mxu0 0.0
        %312 = vmatprep.subr.mxu0 0.0
        %313 = vmatpush1.msra.mxu0 0.0
        %314 = vmatprep.subr.mxu0 0.0
        %315 = vmatpush1.msra.mxu0 0.0
        %316 = vmatprep.subr.mxu0 0.0
        %317 = vmatpush1.msra.mxu0 0.0
        %318 = vmatprep.subr.mxu0 0.0
        %319 = vmatpush1.msra.mxu0 0.0
        %320 = vmatprep.subr.mxu0 0.0
        %321 = vmatpush1.msra.mxu0 0.0
        %322 = vmatprep.subr.mxu0 0.0
        %323 = vmatpush1.msra.mxu0 0.0
        %324 = vmatprep.subr.mxu0 0.0
        %325 = vmatpush1.msra.mxu0 0.0
        %326 = vmatprep.subr.mxu0 0.0
        %327 = vmatpush1.msra.mxu0 0.0
        %328 = vmatprep.subr.mxu0 0.0
        %329 = vmatpush1.msra.mxu0 0.0
        %330 = vmatprep.subr.mxu0 0.0
        %331 = vmatpush1.msra.mxu0 0.0
        %332 = vmatprep.subr.mxu0 0.0
        %333 = vmatpush1.msra.mxu0 0.0
        %334 = vmatprep.subr.mxu0 0.0
        %335 = vmatpush1.msra.mxu0 0.0
        %336 = vmatprep.subr.mxu0 0.0
        %337 = vmatpush1.msra.mxu0 0.0
        %338 = vmatprep.subr.mxu0 0.0
        %339 = vmatpush1.msra.mxu0 0.0
        %340 = vmatprep.mubr.f32.mxu0 0.0
        %341 = vmatmul.mubr.f32.gmra.mrb[0].mxu0 %v271
        %v342 = vpop.f32.mrb[0].mxu0
        %v343 = vadd.f32 0.0, %v342
        %v344 = vpop.f32.mrb[0].mxu0
        %345 = vmatprep.mubr.f32.mxu0 0.0
        %346 = vmatmul.mubr.f32.gmra.mrb[0].mxu0 %v274
        %v347 = vpop.f32.mrb[0].mxu0
        %v348 = vadd.f32 0.0, %v347
        %v349 = vpop.f32.mrb[0].mxu0
        %350 = vdwg.mxu0
        %s351 = scalar_lea.vmem %s230, 16 [#allocation2]
        %v352 = vld [vmem:[%s351] sm:$0xff]
        %v353 = vld [vmem:[%s351 + $0x8] sm:$0xff]
        %v355 = vsel %vm269, %v352, 0
        %v358 = vsel %vm269, %v353, 0
        %360 = vmatprep.subr.mxu0 0.0
        %361 = vmatpush1.msra.mxu0 %v265
        %362 = vmatprep.subr.mxu0 0.0
        %363 = vmatpush1.msra.mxu0 %v266
        %364 = vmatprep.subr.mxu0 0.0
        %365 = vmatpush1.msra.mxu0 0.0
        %366 = vmatprep.subr.mxu0 0.0
        %367 = vmatpush1.msra.mxu0 0.0
        %368 = vmatprep.subr.mxu0 0.0
        %369 = vmatpush1.msra.mxu0 0.0
        %370 = vmatprep.subr.mxu0 0.0
        %371 = vmatpush1.msra.mxu0 0.0
        %372 = vmatprep.subr.mxu0 0.0
        %373 = vmatpush1.msra.mxu0 0.0
        %374 = vmatprep.subr.mxu0 0.0
        %375 = vmatpush1.msra.mxu0 0.0
        %376 = vmatprep.subr.mxu0 0.0
        %377 = vmatpush1.msra.mxu0 0.0
        %378 = vmatprep.subr.mxu0 0.0
        %379 = vmatpush1.msra.mxu0 0.0
        %380 = vmatprep.subr.mxu0 0.0
        %381 = vmatpush1.msra.mxu0 0.0
        %382 = vmatprep.subr.mxu0 0.0
        %383 = vmatpush1.msra.mxu0 0.0
        %384 = vmatprep.subr.mxu0 0.0
        %385 = vmatpush1.msra.mxu0 0.0
        %386 = vmatprep.subr.mxu0 0.0
        %387 = vmatpush1.msra.mxu0 0.0
        %388 = vmatprep.subr.mxu0 0.0
        %389 = vmatpush1.msra.mxu0 0.0
        %390 = vmatprep.subr.mxu0 0.0
        %391 = vmatpush1.msra.mxu0 0.0
        %392 = vmatprep.subr.mxu0 0.0
        %393 = vmatpush1.msra.mxu0 0.0
        %394 = vmatprep.subr.mxu0 0.0
        %395 = vmatpush1.msra.mxu0 0.0
        %396 = vmatprep.subr.mxu0 0.0
        %397 = vmatpush1.msra.mxu0 0.0
        %398 = vmatprep.subr.mxu0 0.0
        %399 = vmatpush1.msra.mxu0 0.0
        %400 = vmatprep.subr.mxu0 0.0
        %401 = vmatpush1.msra.mxu0 0.0
        %402 = vmatprep.subr.mxu0 0.0
        %403 = vmatpush1.msra.mxu0 0.0
        %404 = vmatprep.subr.mxu0 0.0
        %405 = vmatpush1.msra.mxu0 0.0
        %406 = vmatprep.subr.mxu0 0.0
        %407 = vmatpush1.msra.mxu0 0.0
        %408 = vmatprep.subr.mxu0 0.0
        %409 = vmatpush1.msra.mxu0 0.0
        %410 = vmatprep.subr.mxu0 0.0
        %411 = vmatpush1.msra.mxu0 0.0
        %412 = vmatprep.subr.mxu0 0.0
        %413 = vmatpush1.msra.mxu0 0.0
        %414 = vmatprep.subr.mxu0 0.0
        %415 = vmatpush1.msra.mxu0 0.0
        %416 = vmatprep.subr.mxu0 0.0
        %417 = vmatpush1.msra.mxu0 0.0
        %418 = vmatprep.subr.mxu0 0.0
        %419 = vmatpush1.msra.mxu0 0.0
        %420 = vmatprep.subr.mxu0 0.0
        %421 = vmatpush1.msra.mxu0 0.0
        %422 = vmatprep.subr.mxu0 0.0
        %423 = vmatpush1.msra.mxu0 0.0
        %424 = vmatprep.mubr.f32.mxu0 0.0
        %425 = vmatmul.mubr.f32.gmra.mrb[0].mxu0 %v355
        %v426 = vpop.f32.mrb[0].mxu0
        %v427 = vadd.f32 0.0, %v426
        %v428 = vpop.f32.mrb[0].mxu0
        %429 = vmatprep.mubr.f32.mxu0 0.0
        %430 = vmatmul.mubr.f32.gmra.mrb[0].mxu0 %v358
        %v431 = vpop.f32.mrb[0].mxu0
        %v432 = vadd.f32 0.0, %v431
        %v433 = vpop.f32.mrb[0].mxu0
        %434 = vdwg.mxu0
        %s435 = scalar_lea.vmem %s230, 32 [#allocation2]
        %v436 = vld [vmem:[%s435] sm:$0xff]
        %v437 = vld [vmem:[%s435 + $0x8] sm:$0xff]
        %v439 = vsel %vm269, %v436, 0
        %v442 = vsel %vm269, %v437, 0
        %444 = vmatprep.subr.mxu0 0.0
        %445 = vmatpush1.msra.mxu0 %v265
        %446 = vmatprep.subr.mxu0 0.0
        %447 = vmatpush1.msra.mxu0 %v266
        %448 = vmatprep.subr.mxu0 0.0
        %449 = vmatpush1.msra.mxu0 0.0
        %450 = vmatprep.subr.mxu0 0.0
        %451 = vmatpush1.msra.mxu0 0.0
        %452 = vmatprep.subr.mxu0 0.0
        %453 = vmatpush1.msra.mxu0 0.0
        %454 = vmatprep.subr.mxu0 0.0
        %455 = vmatpush1.msra.mxu0 0.0
        %456 = vmatprep.subr.mxu0 0.0
        %457 = vmatpush1.msra.mxu0 0.0
        %458 = vmatprep.subr.mxu0 0.0
        %459 = vmatpush1.msra.mxu0 0.0
        %460 = vmatprep.subr.mxu0 0.0
        %461 = vmatpush1.msra.mxu0 0.0
        %462 = vmatprep.subr.mxu0 0.0
        %463 = vmatpush1.msra.mxu0 0.0
        %464 = vmatprep.subr.mxu0 0.0
        %465 = vmatpush1.msra.mxu0 0.0
        %466 = vmatprep.subr.mxu0 0.0
        %467 = vmatpush1.msra.mxu0 0.0
        %468 = vmatprep.subr.mxu0 0.0
        %469 = vmatpush1.msra.mxu0 0.0
        %470 = vmatprep.subr.mxu0 0.0
        %471 = vmatpush1.msra.mxu0 0.0
        %472 = vmatprep.subr.mxu0 0.0
        %473 = vmatpush1.msra.mxu0 0.0
        %474 = vmatprep.subr.mxu0 0.0
        %475 = vmatpush1.msra.mxu0 0.0
        %476 = vmatprep.subr.mxu0 0.0
        %477 = vmatpush1.msra.mxu0 0.0
        %478 = vmatprep.subr.mxu0 0.0
        %479 = vmatpush1.msra.mxu0 0.0
        %480 = vmatprep.subr.mxu0 0.0
        %481 = vmatpush1.msra.mxu0 0.0
        %482 = vmatprep.subr.mxu0 0.0
        %483 = vmatpush1.msra.mxu0 0.0
        %484 = vmatprep.subr.mxu0 0.0
        %485 = vmatpush1.msra.mxu0 0.0
        %486 = vmatprep.subr.mxu0 0.0
        %487 = vmatpush1.msra.mxu0 0.0
        %488 = vmatprep.subr.mxu0 0.0
        %489 = vmatpush1.msra.mxu0 0.0
        %490 = vmatprep.subr.mxu0 0.0
        %491 = vmatpush1.msra.mxu0 0.0
        %492 = vmatprep.subr.mxu0 0.0
        %493 = vmatpush1.msra.mxu0 0.0
        %494 = vmatprep.subr.mxu0 0.0
        %495 = vmatpush1.msra.mxu0 0.0
        %496 = vmatprep.subr.mxu0 0.0
        %497 = vmatpush1.msra.mxu0 0.0
        %498 = vmatprep.subr.mxu0 0.0
        %499 = vmatpush1.msra.mxu0 0.0
        %500 = vmatprep.subr.mxu0 0.0
        %501 = vmatpush1.msra.mxu0 0.0
        %502 = vmatprep.subr.mxu0 0.0
        %503 = vmatpush1.msra.mxu0 0.0
        %504 = vmatprep.subr.mxu0 0.0
        %505 = vmatpush1.msra.mxu0 0.0
        %506 = vmatprep.subr.mxu0 0.0
        %507 = vmatpush1.msra.mxu0 0.0
        %508 = vmatprep.mubr.f32.mxu0 0.0
        %509 = vmatmul.mubr.f32.gmra.mrb[0].mxu0 %v439
        %v510 = vpop.f32.mrb[0].mxu0
        %v511 = vadd.f32 0.0, %v510
        %v512 = vpop.f32.mrb[0].mxu0
        %513 = vmatprep.mubr.f32.mxu0 0.0
        %514 = vmatmul.mubr.f32.gmra.mrb[0].mxu0 %v442
        %v515 = vpop.f32.mrb[0].mxu0
        %v516 = vadd.f32 0.0, %v515
        %v517 = vpop.f32.mrb[0].mxu0
        %518 = vdwg.mxu0
        %s519 = scalar_lea.vmem %s230, 48 [#allocation2]
        %v520 = vld [vmem:[%s519] sm:$0xff]
        %v521 = vld [vmem:[%s519 + $0x8] sm:$0xff]
        %v523 = vsel %vm269, %v520, 0
        %v526 = vsel %vm269, %v521, 0
        %528 = vmatprep.subr.mxu0 0.0
        %529 = vmatpush1.msra.mxu0 %v265
        %530 = vmatprep.subr.mxu0 0.0
        %531 = vmatpush1.msra.mxu0 %v266
        %532 = vmatprep.subr.mxu0 0.0
        %533 = vmatpush1.msra.mxu0 0.0
        %534 = vmatprep.subr.mxu0 0.0
        %535 = vmatpush1.msra.mxu0 0.0
        %536 = vmatprep.subr.mxu0 0.0
        %537 = vmatpush1.msra.mxu0 0.0
        %538 = vmatprep.subr.mxu0 0.0
        %539 = vmatpush1.msra.mxu0 0.0
        %540 = vmatprep.subr.mxu0 0.0
        %541 = vmatpush1.msra.mxu0 0.0
        %542 = vmatprep.subr.mxu0 0.0
        %543 = vmatpush1.msra.mxu0 0.0
        %544 = vmatprep.subr.mxu0 0.0
        %545 = vmatpush1.msra.mxu0 0.0
        %546 = vmatprep.subr.mxu0 0.0
        %547 = vmatpush1.msra.mxu0 0.0
        %548 = vmatprep.subr.mxu0 0.0
        %549 = vmatpush1.msra.mxu0 0.0
        %550 = vmatprep.subr.mxu0 0.0
        %551 = vmatpush1.msra.mxu0 0.0
        %552 = vmatprep.subr.mxu0 0.0
        %553 = vmatpush1.msra.mxu0 0.0
        %554 = vmatprep.subr.mxu0 0.0
        %555 = vmatpush1.msra.mxu0 0.0
        %556 = vmatprep.subr.mxu0 0.0
        %557 = vmatpush1.msra.mxu0 0.0
        %558 = vmatprep.subr.mxu0 0.0
        %559 = vmatpush1.msra.mxu0 0.0
        %560 = vmatprep.subr.mxu0 0.0
        %561 = vmatpush1.msra.mxu0 0.0
        %562 = vmatprep.subr.mxu0 0.0
        %563 = vmatpush1.msra.mxu0 0.0
        %564 = vmatprep.subr.mxu0 0.0
        %565 = vmatpush1.msra.mxu0 0.0
        %566 = vmatprep.subr.mxu0 0.0
        %567 = vmatpush1.msra.mxu0 0.0
        %568 = vmatprep.subr.mxu0 0.0
        %569 = vmatpush1.msra.mxu0 0.0
        %570 = vmatprep.subr.mxu0 0.0
        %571 = vmatpush1.msra.mxu0 0.0
        %572 = vmatprep.subr.mxu0 0.0
        %573 = vmatpush1.msra.mxu0 0.0
        %574 = vmatprep.subr.mxu0 0.0
        %575 = vmatpush1.msra.mxu0 0.0
        %576 = vmatprep.subr.mxu0 0.0
        %577 = vmatpush1.msra.mxu0 0.0
        %578 = vmatprep.subr.mxu0 0.0
        %579 = vmatpush1.msra.mxu0 0.0
        %580 = vmatprep.subr.mxu0 0.0
        %581 = vmatpush1.msra.mxu0 0.0
        %582 = vmatprep.subr.mxu0 0.0
        %583 = vmatpush1.msra.mxu0 0.0
        %584 = vmatprep.subr.mxu0 0.0
        %585 = vmatpush1.msra.mxu0 0.0
        %586 = vmatprep.subr.mxu0 0.0
        %587 = vmatpush1.msra.mxu0 0.0
        %588 = vmatprep.subr.mxu0 0.0
        %589 = vmatpush1.msra.mxu0 0.0
        %590 = vmatprep.subr.mxu0 0.0
        %591 = vmatpush1.msra.mxu0 0.0
        %592 = vmatprep.mubr.f32.mxu0 0.0
        %593 = vmatmul.mubr.f32.gmra.mrb[0].mxu0 %v523
        %v594 = vpop.f32.mrb[0].mxu0
        %v595 = vadd.f32 0.0, %v594
        %v596 = vpop.f32.mrb[0].mxu0
        %597 = vmatprep.mubr.f32.mxu0 0.0
        %598 = vmatmul.mubr.f32.gmra.mrb[0].mxu0 %v526
        %v599 = vpop.f32.mrb[0].mxu0
        %v600 = vadd.f32 0.0, %v599
        %v601 = vpop.f32.mrb[0].mxu0
        %602 = vdwg.mxu0
        %v603 = vld [vmem:[%s3] sm:$0x1]
        %v604 = vld [vmem:[#allocation7] sm:$0x1]
        %v605 = vlaneseq
        %v606 = vshrl.u32 %v605, 7
        %v607 = vsub.s32 0, %v606
        %v608 = vrot.slane %v604, %v607
        %v609 = vmul.f32 %v608, %v343
        %v610 = vmul.f32 %v608, %v348
        %v611 = vlaneseq
        %v612 = vshrl.u32 %v611, 7
        %v613 = vsub.s32 0, %v612
        %v614 = vrot.slane %v603, %v613
        %v615 = vadd.f32 %v614, %v609
        %v616 = vadd.f32 %v614, %v610
        %v617 = vld [vmem:[#allocation7 + $0x1] sm:$0x1]
        %v618 = vlaneseq
        %v619 = vshrl.u32 %v618, 7
        %v620 = vsub.s32 0, %v619
        %v621 = vrot.slane %v617, %v620
        %v622 = vmul.f32 %v621, %v427
        %v623 = vmul.f32 %v621, %v432
        %v624 = vadd.f32 %v615, %v622
        %v625 = vadd.f32 %v616, %v623
        %v626 = vld [vmem:[#allocation7 + $0x2] sm:$0x1]
        %v627 = vlaneseq
        %v628 = vshrl.u32 %v627, 7
        %v629 = vsub.s32 0, %v628
        %v630 = vrot.slane %v626, %v629
        %v631 = vmul.f32 %v630, %v511
        %v632 = vmul.f32 %v630, %v516
        %v633 = vadd.f32 %v624, %v631
        %v634 = vadd.f32 %v625, %v632
        %v635 = vld [vmem:[#allocation7 + $0x3] sm:$0x1]
        %v636 = vlaneseq
        %v637 = vshrl.u32 %v636, 7
        %v638 = vsub.s32 0, %v637
        %v639 = vrot.slane %v635, %v638
        %v640 = vmul.f32 %v639, %v595
        %v641 = vmul.f32 %v639, %v600
        %v642 = vadd.f32 %v633, %v640
        %v643 = vadd.f32 %v634, %v641
        %v644 = vmul.f32 %v642, 0.01
        %v645 = vmul.f32 %v643, 0.01
        %v646 = vmax.f32 %v642, %v644
        %v647 = vmax.f32 %v643, %v645
        %vm648 = vcmask 523264
        %649 = vst.msk [vmem:[%s262] sm:$0xff] %vm648, %v646
        %650 = vst.msk [vmem:[%s262 + $0x8] sm:$0xff] %vm648, %v647
        %v651 = vld [vmem:[%s3 + $0x1] sm:$0x1]
        %v652 = vld [vmem:[#allocation7 + $0x4] sm:$0x1]
        %v653 = vlaneseq
        %v654 = vshrl.u32 %v653, 7
        %v655 = vsub.s32 0, %v654
        %v656 = vrot.slane %v652, %v655
        %v657 = vmul.f32 %v656, %v343
        %v658 = vmul.f32 %v656, %v348
        %v659 = vlaneseq
        %v660 = vshrl.u32 %v659, 7
        %v661 = vsub.s32 0, %v660
        %v662 = vrot.slane %v651, %v661
        %v663 = vadd.f32 %v662, %v657
        %v664 = vadd.f32 %v662, %v658
        %v665 = vld [vmem:[#allocation7 + $0x5] sm:$0x1]
        %v666 = vlaneseq
        %v667 = vshrl.u32 %v666, 7
        %v668 = vsub.s32 0, %v667
        %v669 = vrot.slane %v665, %v668
        %v670 = vmul.f32 %v669, %v427
        %v671 = vmul.f32 %v669, %v432
        %v672 = vadd.f32 %v663, %v670
        %v673 = vadd.f32 %v664, %v671
        %v674 = vld [vmem:[#allocation7 + $0x6] sm:$0x1]
        %v675 = vlaneseq
        %v676 = vshrl.u32 %v675, 7
        %v677 = vsub.s32 0, %v676
        %v678 = vrot.slane %v674, %v677
        %v679 = vmul.f32 %v678, %v511
        %v680 = vmul.f32 %v678, %v516
        %v681 = vadd.f32 %v672, %v679
        %v682 = vadd.f32 %v673, %v680
        %v683 = vld [vmem:[#allocation7 + $0x7] sm:$0x1]
        %v684 = vlaneseq
        %v685 = vshrl.u32 %v684, 7
        %v686 = vsub.s32 0, %v685
        %v687 = vrot.slane %v683, %v686
        %v688 = vmul.f32 %v687, %v595
        %v689 = vmul.f32 %v687, %v600
        %v690 = vadd.f32 %v681, %v688
        %v691 = vadd.f32 %v682, %v689
        %v692 = vmul.f32 %v690, 0.01
        %v693 = vmul.f32 %v691, 0.01
        %v694 = vmax.f32 %v690, %v692
        %v695 = vmax.f32 %v691, %v693
        %s696 = scalar_lea.vmem %s262, 16 [#allocation8]
        %697 = vst.msk [vmem:[%s696] sm:$0xff] %vm648, %v694
        %698 = vst.msk [vmem:[%s696 + $0x8] sm:$0xff] %vm648, %v695
        %v699 = vld [vmem:[%s3 + $0x2] sm:$0x1]
        %v700 = vld [vmem:[#allocation7 + $0x8] sm:$0x1]
        %v701 = vlaneseq
        %v702 = vshrl.u32 %v701, 7
        %v703 = vsub.s32 0, %v702
        %v704 = vrot.slane %v700, %v703
        %v705 = vmul.f32 %v704, %v343
        %v706 = vmul.f32 %v704, %v348
        %v707 = vlaneseq
        %v708 = vshrl.u32 %v707, 7
        %v709 = vsub.s32 0, %v708
        %v710 = vrot.slane %v699, %v709
        %v711 = vadd.f32 %v710, %v705
        %v712 = vadd.f32 %v710, %v706
        %v713 = vld [vmem:[#allocation7 + $0x9] sm:$0x1]
        %v714 = vlaneseq
        %v715 = vshrl.u32 %v714, 7
        %v716 = vsub.s32 0, %v715
        %v717 = vrot.slane %v713, %v716
        %v718 = vmul.f32 %v717, %v427
        %v719 = vmul.f32 %v717, %v432
        %v720 = vadd.f32 %v711, %v718
        %v721 = vadd.f32 %v712, %v719
        %v722 = vld [vmem:[#allocation7 + $0xa] sm:$0x1]
        %v723 = vlaneseq
        %v724 = vshrl.u32 %v723, 7
        %v725 = vsub.s32 0, %v724
        %v726 = vrot.slane %v722, %v725
        %v727 = vmul.f32 %v726, %v511
        %v728 = vmul.f32 %v726, %v516
        %v729 = vadd.f32 %v720, %v727
        %v730 = vadd.f32 %v721, %v728
        %v731 = vld [vmem:[#allocation7 + $0xb] sm:$0x1]
        %v732 = vlaneseq
        %v733 = vshrl.u32 %v732, 7
        %v734 = vsub.s32 0, %v733
        %v735 = vrot.slane %v731, %v734
        %v736 = vmul.f32 %v735, %v595
        %v737 = vmul.f32 %v735, %v600
        %v738 = vadd.f32 %v729, %v736
        %v739 = vadd.f32 %v730, %v737
        %v740 = vmul.f32 %v738, 0.01
        %v741 = vmul.f32 %v739, 0.01
        %v742 = vmax.f32 %v738, %v740
        %v743 = vmax.f32 %v739, %v741
        %s744 = scalar_lea.vmem %s262, 32 [#allocation8]
        %745 = vst.msk [vmem:[%s744] sm:$0xff] %vm648, %v742
        %746 = vst.msk [vmem:[%s744 + $0x8] sm:$0xff] %vm648, %v743
        %v747 = vld [vmem:[%s3 + $0x3] sm:$0x1]
        %v748 = vld [vmem:[#allocation7 + $0xc] sm:$0x1]
        %v749 = vlaneseq
        %v750 = vshrl.u32 %v749, 7
        %v751 = vsub.s32 0, %v750
        %v752 = vrot.slane %v748, %v751
        %v753 = vmul.f32 %v752, %v343
        %v754 = vmul.f32 %v752, %v348
        %v755 = vlaneseq
        %v756 = vshrl.u32 %v755, 7
        %v757 = vsub.s32 0, %v756
        %v758 = vrot.slane %v747, %v757
        %v759 = vadd.f32 %v758, %v753
        %v760 = vadd.f32 %v758, %v754
        %v761 = vld [vmem:[#allocation7 + $0xd] sm:$0x1]
        %v762 = vlaneseq
        %v763 = vshrl.u32 %v762, 7
        %v764 = vsub.s32 0, %v763
        %v765 = vrot.slane %v761, %v764
        %v766 = vmul.f32 %v765, %v427
        %v767 = vmul.f32 %v765, %v432
        %v768 = vadd.f32 %v759, %v766
        %v769 = vadd.f32 %v760, %v767
        %v770 = vld [vmem:[#allocation7 + $0xe] sm:$0x1]
        %v771 = vlaneseq
        %v772 = vshrl.u32 %v771, 7
        %v773 = vsub.s32 0, %v772
        %v774 = vrot.slane %v770, %v773
        %v775 = vmul.f32 %v774, %v511
        %v776 = vmul.f32 %v774, %v516
        %v777 = vadd.f32 %v768, %v775
        %v778 = vadd.f32 %v769, %v776
        %v779 = vld [vmem:[#allocation7 + $0xf] sm:$0x1]
        %v780 = vlaneseq
        %v781 = vshrl.u32 %v780, 7
        %v782 = vsub.s32 0, %v781
        %v783 = vrot.slane %v779, %v782
        %v784 = vmul.f32 %v783, %v595
        %v785 = vmul.f32 %v783, %v600
        %v786 = vadd.f32 %v777, %v784
        %v787 = vadd.f32 %v778, %v785
        %v788 = vmul.f32 %v786, 0.01
        %v789 = vmul.f32 %v787, 0.01
        %v790 = vmax.f32 %v786, %v788
        %v791 = vmax.f32 %v787, %v789
        %s792 = scalar_lea.vmem %s262, 48 [#allocation8]
        %793 = vst.msk [vmem:[%s792] sm:$0xff] %vm648, %v790
        %794 = vst.msk [vmem:[%s792 + $0x8] sm:$0xff] %vm648, %v791
        %v795 = vld [vmem:[%s3 + $0x4] sm:$0x1]
        %v796 = vld [vmem:[#allocation7 + $0x10] sm:$0x1]
        %v797 = vlaneseq
        %v798 = vshrl.u32 %v797, 7
        %v799 = vsub.s32 0, %v798
        %v800 = vrot.slane %v796, %v799
        %v801 = vmul.f32 %v800, %v343
        %v802 = vmul.f32 %v800, %v348
        %v803 = vlaneseq
        %v804 = vshrl.u32 %v803, 7
        %v805 = vsub.s32 0, %v804
        %v806 = vrot.slane %v795, %v805
        %v807 = vadd.f32 %v806, %v801
        %v808 = vadd.f32 %v806, %v802
        %v809 = vld [vmem:[#allocation7 + $0x11] sm:$0x1]
        %v810 = vlaneseq
        %v811 = vshrl.u32 %v810, 7
        %v812 = vsub.s32 0, %v811
        %v813 = vrot.slane %v809, %v812
        %v814 = vmul.f32 %v813, %v427
        %v815 = vmul.f32 %v813, %v432
        %v816 = vadd.f32 %v807, %v814
        %v817 = vadd.f32 %v808, %v815
        %v818 = vld [vmem:[#allocation7 + $0x12] sm:$0x1]
        %v819 = vlaneseq
        %v820 = vshrl.u32 %v819, 7
        %v821 = vsub.s32 0, %v820
        %v822 = vrot.slane %v818, %v821
        %v823 = vmul.f32 %v822, %v511
        %v824 = vmul.f32 %v822, %v516
        %v825 = vadd.f32 %v816, %v823
        %v826 = vadd.f32 %v817, %v824
        %v827 = vld [vmem:[#allocation7 + $0x13] sm:$0x1]
        %v828 = vlaneseq
        %v829 = vshrl.u32 %v828, 7
        %v830 = vsub.s32 0, %v829
        %v831 = vrot.slane %v827, %v830
        %v832 = vmul.f32 %v831, %v595
        %v833 = vmul.f32 %v831, %v600
        %v834 = vadd.f32 %v825, %v832
        %v835 = vadd.f32 %v826, %v833
        %v836 = vmul.f32 %v834, 0.01
        %v837 = vmul.f32 %v835, 0.01
        %v838 = vmax.f32 %v834, %v836
        %v839 = vmax.f32 %v835, %v837
        %s840 = scalar_lea.vmem %s262, 64 [#allocation8]
        %841 = vst.msk [vmem:[%s840] sm:$0xff] %vm648, %v838
        %842 = vst.msk [vmem:[%s840 + $0x8] sm:$0xff] %vm648, %v839
        %v843 = vld [vmem:[%s3 + $0x5] sm:$0x1]
        %v844 = vld [vmem:[#allocation7 + $0x14] sm:$0x1]
        %v845 = vlaneseq
        %v846 = vshrl.u32 %v845, 7
        %v847 = vsub.s32 0, %v846
        %v848 = vrot.slane %v844, %v847
        %v849 = vmul.f32 %v848, %v343
        %v850 = vmul.f32 %v848, %v348
        %v851 = vlaneseq
        %v852 = vshrl.u32 %v851, 7
        %v853 = vsub.s32 0, %v852
        %v854 = vrot.slane %v843, %v853
        %v855 = vadd.f32 %v854, %v849
        %v856 = vadd.f32 %v854, %v850
        %v857 = vld [vmem:[#allocation7 + $0x15] sm:$0x1]
        %v858 = vlaneseq
        %v859 = vshrl.u32 %v858, 7
        %v860 = vsub.s32 0, %v859
        %v861 = vrot.slane %v857, %v860
        %v862 = vmul.f32 %v861, %v427
        %v863 = vmul.f32 %v861, %v432
        %v864 = vadd.f32 %v855, %v862
        %v865 = vadd.f32 %v856, %v863
        %v866 = vld [vmem:[#allocation7 + $0x16] sm:$0x1]
        %v867 = vlaneseq
        %v868 = vshrl.u32 %v867, 7
        %v869 = vsub.s32 0, %v868
        %v870 = vrot.slane %v866, %v869
        %v871 = vmul.f32 %v870, %v511
        %v872 = vmul.f32 %v870, %v516
        %v873 = vadd.f32 %v864, %v871
        %v874 = vadd.f32 %v865, %v872
        %v875 = vld [vmem:[#allocation7 + $0x17] sm:$0x1]
        %v876 = vlaneseq
        %v877 = vshrl.u32 %v876, 7
        %v878 = vsub.s32 0, %v877
        %v879 = vrot.slane %v875, %v878
        %v880 = vmul.f32 %v879, %v595
        %v881 = vmul.f32 %v879, %v600
        %v882 = vadd.f32 %v873, %v880
        %v883 = vadd.f32 %v874, %v881
        %v884 = vmul.f32 %v882, 0.01
        %v885 = vmul.f32 %v883, 0.01
        %v886 = vmax.f32 %v882, %v884
        %v887 = vmax.f32 %v883, %v885
        %s888 = scalar_lea.vmem %s262, 80 [#allocation8]
        %889 = vst.msk [vmem:[%s888] sm:$0xff] %vm648, %v886
        %890 = vst.msk [vmem:[%s888 + $0x8] sm:$0xff] %vm648, %v887
        %v891 = vld [vmem:[%s3 + $0x6] sm:$0x1]
        %v892 = vld [vmem:[#allocation7 + $0x18] sm:$0x1]
        %v893 = vlaneseq
        %v894 = vshrl.u32 %v893, 7
        %v895 = vsub.s32 0, %v894
        %v896 = vrot.slane %v892, %v895
        %v897 = vmul.f32 %v896, %v343
        %v898 = vmul.f32 %v896, %v348
        %v899 = vlaneseq
        %v900 = vshrl.u32 %v899, 7
        %v901 = vsub.s32 0, %v900
        %v902 = vrot.slane %v891, %v901
        %v903 = vadd.f32 %v902, %v897
        %v904 = vadd.f32 %v902, %v898
        %v905 = vld [vmem:[#allocation7 + $0x19] sm:$0x1]
        %v906 = vlaneseq
        %v907 = vshrl.u32 %v906, 7
        %v908 = vsub.s32 0, %v907
        %v909 = vrot.slane %v905, %v908
        %v910 = vmul.f32 %v909, %v427
        %v911 = vmul.f32 %v909, %v432
        %v912 = vadd.f32 %v903, %v910
        %v913 = vadd.f32 %v904, %v911
        %v914 = vld [vmem:[#allocation7 + $0x1a] sm:$0x1]
        %v915 = vlaneseq
        %v916 = vshrl.u32 %v915, 7
        %v917 = vsub.s32 0, %v916
        %v918 = vrot.slane %v914, %v917
        %v919 = vmul.f32 %v918, %v511
        %v920 = vmul.f32 %v918, %v516
        %v921 = vadd.f32 %v912, %v919
        %v922 = vadd.f32 %v913, %v920
        %v923 = vld [vmem:[#allocation7 + $0x1b] sm:$0x1]
        %v924 = vlaneseq
        %v925 = vshrl.u32 %v924, 7
        %v926 = vsub.s32 0, %v925
        %v927 = vrot.slane %v923, %v926
        %v928 = vmul.f32 %v927, %v595
        %v929 = vmul.f32 %v927, %v600
        %v930 = vadd.f32 %v921, %v928
        %v931 = vadd.f32 %v922, %v929
        %v932 = vmul.f32 %v930, 0.01
        %v933 = vmul.f32 %v931, 0.01
        %v934 = vmax.f32 %v930, %v932
        %v935 = vmax.f32 %v931, %v933
        %s936 = scalar_lea.vmem %s262, 96 [#allocation8]
        %937 = vst.msk [vmem:[%s936] sm:$0xff] %vm648, %v934
        %938 = vst.msk [vmem:[%s936 + $0x8] sm:$0xff] %vm648, %v935
        %v939 = vld [vmem:[%s3 + $0x7] sm:$0x1]
        %v940 = vld [vmem:[#allocation7 + $0x1c] sm:$0x1]
        %v941 = vlaneseq
        %v942 = vshrl.u32 %v941, 7
        %v943 = vsub.s32 0, %v942
        %v944 = vrot.slane %v940, %v943
        %v945 = vmul.f32 %v944, %v343
        %v946 = vmul.f32 %v944, %v348
        %v947 = vlaneseq
        %v948 = vshrl.u32 %v947, 7
        %v949 = vsub.s32 0, %v948
        %v950 = vrot.slane %v939, %v949
        %v951 = vadd.f32 %v950, %v945
        %v952 = vadd.f32 %v950, %v946
        %v953 = vld [vmem:[#allocation7 + $0x1d] sm:$0x1]
        %v954 = vlaneseq
        %v955 = vshrl.u32 %v954, 7
        %v956 = vsub.s32 0, %v955
        %v957 = vrot.slane %v953, %v956
        %v958 = vmul.f32 %v957, %v427
        %v959 = vmul.f32 %v957, %v432
        %v960 = vadd.f32 %v951, %v958
        %v961 = vadd.f32 %v952, %v959
        %v962 = vld [vmem:[#allocation7 + $0x1e] sm:$0x1]
        %v963 = vlaneseq
        %v964 = vshrl.u32 %v963, 7
        %v965 = vsub.s32 0, %v964
        %v966 = vrot.slane %v962, %v965
        %v967 = vmul.f32 %v966, %v511
        %v968 = vmul.f32 %v966, %v516
        %v969 = vadd.f32 %v960, %v967
        %v970 = vadd.f32 %v961, %v968
        %v971 = vld [vmem:[#allocation7 + $0x1f] sm:$0x1]
        %v972 = vlaneseq
        %v973 = vshrl.u32 %v972, 7
        %v974 = vsub.s32 0, %v973
        %v975 = vrot.slane %v971, %v974
        %v976 = vmul.f32 %v975, %v595
        %v977 = vmul.f32 %v975, %v600
        %v978 = vadd.f32 %v969, %v976
        %v979 = vadd.f32 %v970, %v977
        %v980 = vmul.f32 %v978, 0.01
        %v981 = vmul.f32 %v979, 0.01
        %v982 = vmax.f32 %v978, %v980
        %v983 = vmax.f32 %v979, %v981
        %s984 = scalar_lea.vmem %s262, 112 [#allocation8]
        %985 = vst.msk [vmem:[%s984] sm:$0xff] %vm648, %v982
        %986 = vst.msk [vmem:[%s984 + $0x8] sm:$0xff] %vm648, %v983
        %s987 = sand.u32 %s135, 1
        %s988 = scalar_lea.sflag [#allocation4], %s987
        %s989 = sand.u32 %s135, 1
        %s990 = smul.addr %s989, 128
        %s991 = scalar_lea.vmem [#allocation8], %s990
        // Predicated region
        $region49: #{tpu_custom_call.1} parent=35 // pred_check
          %p992 = pneg %p145
        $region50: #{tpu_custom_call.1} parent=35 // pred_check_branch
          %994 = sbr.rel (%p992) target = $region52
        $region51: #{tpu_custom_call.1} parent=35 // pred_region
          %s995 = smul.u32 2, %s27
          %s997 = ssub.s32 2048, 2048
          %998 = vsyncadd %s988, %s997
          %s999 = smul.addr %s26, 16
          %s1000 = sadd.s32 %s995, %s999
          %s1001 = smul.addr %s1000, 128
          %s1002 = scalar_lea.hbm %s4, %s1001
          %s1003 = sshll.u32 %s991, 4
          %s1004 = int_to_ptr.vmem [resolvable:$true] %s1003
          %1009 = dma.vmem_to_hbm [thread:$0]  %s1004, 2048, %s1002, %s988, 128, 128, 8
        $region52: #{tpu_custom_call.1} parent=35 // pred_fallthru
          _
      $region36: #{tpu_custom_call.1} parent=5 // pred_fallthru
        _
      %p1010 = scmp.le.s32.totalorder 2, %s17
      // Predicated region
      $region53: #{tpu_custom_call.1} parent=5 // pred_check
        %p1011 = pneg %p1010
      $region54: #{tpu_custom_call.1} parent=5 // pred_check_branch
        %1013 = sbr.rel (%p1011) target = $region56
      $region55: #{tpu_custom_call.1} parent=5 // pred_region
        %s1014 = ssub.s32 %s17, 2
        // Predicated region
        $region57: #{tpu_custom_call.1} parent=55 // pred_check
          %p1015 = pneg %p151
        $region58: #{tpu_custom_call.1} parent=55 // pred_check_branch
          %1017 = sbr.rel (%p1015) target = $region60
        $region59: #{tpu_custom_call.1} parent=55 // pred_region
          %s1018 = sand.u32 %s136, 1
          %s1019 = scalar_lea.sflag [#allocation4], %s1018
          %s1020 = sand.u32 %s136, 1
          %s1021 = smul.addr %s1020, 128
          %s1022 = scalar_lea.vmem [#allocation8], %s1021
          %1023 = dma.done %s1019, 2048
        $region60: #{tpu_custom_call.1} parent=55 // pred_fallthru
          _
      $region56: #{tpu_custom_call.1} parent=5 // pred_fallthru
        _
    $region6: #{tpu_custom_call.1} parent=1 // loop_footer
      %s21 = sadd.s32 1, %s17
    $region7: #{tpu_custom_call.1} parent=1 // loop_footer_branch
      %16 = sbr.rel target = $region3
    $region8: #{tpu_custom_call.1} parent=1 // loop_exit
      _
    %1024 = vsyncpa [#allocation3], 1
    %s1025 = scalar_lea.sflag [#allocation3], 1
    %1026 = vsyncpa %s1025, 1
    %1027 = vsyncpa [#allocation6], 1
    %1028 = vsyncpa [#allocation4], 1
    %s1029 = scalar_lea.sflag [#allocation4], 1
    %1030 = vsyncpa %s1029, 1

</llo_original>
